<compile_context>
chip_gen: v7x
topology: tpu7x:2x2x1
jax: 0.10.0
libtpu: 0.0.40
codegen_flags: <defaults>
</compile_context>

<pallas_src>
import math
from functools import partial

import jax
import jax.numpy as jnp
import numpy as np
from jax import lax
from jax.experimental import pallas as pl
from jax.experimental.pallas import tpu as pltpu


def _lane_roll(a, shift, size):
    shift %= size
    return a if shift == 0 else pltpu.roll(a, shift=shift, axis=1)


def _sub_roll(a, shift, size):
    shift %= size
    return a if shift == 0 else pltpu.roll(a, shift=shift, axis=0)


def _row_neighbors(x, W, k, rpi):
    """x: (bg, L=k*W) block holding WHOLE images; global image-row g = R*k + s, s = lane // W.

    Returns (x_up, x_dn) = x[reflect(r-1)], x[reflect(r+1)] of the same image (reflection pad
    fused; the selects also repair cross-image and cross-block wrap from the folding)."""
    bg, L = x.shape

    # raw g-1 / g+1 neighbors: lane roll by +/-W; the first/last lane segment additionally
    # wraps into the adjacent folded (sublane) row.
    up_a = _lane_roll(x, W, L)
    dn_a = _lane_roll(x, L - W, L)
    if k > 1:
        lane = lax.broadcasted_iota(jnp.int32, (1, L), 1)
        seg_first = lane < W            # s == 0
        seg_last = lane >= L - W        # s == k-1
        up_raw = jnp.where(seg_first, _sub_roll(up_a, 1, bg), up_a)          # x[g-1]
        dn_raw = jnp.where(seg_last, _sub_roll(dn_a, bg - 1, bg), dn_a)      # x[g+1]
    else:
        seg_first = seg_last = None
        up_raw = _sub_roll(up_a, 1, bg)
        dn_raw = _sub_roll(dn_a, bg - 1, bg)

    # Reflection at the image's first/last row. Blocks are image-aligned, so the block-local
    # folded-row index mod rpi equals the image-local one (no program_id needed).
    if rpi > 1:
        row_mod = lax.broadcasted_iota(jnp.int32, (bg, 1), 0) % rpi
        top = row_mod == 0
        bot = row_mod == rpi - 1
        if seg_first is not None:
            top = top & seg_first
            bot = bot & seg_last
    else:                               # k == H: every lane-segment boundary is an image row 0/H-1
        top = seg_first
        bot = seg_last
    x_up = jnp.where(top, dn_raw, up_raw)     # row r-1, reflected, no cross-image bleed
    x_dn = jnp.where(bot, up_raw, dn_raw)     # row r+1, reflected
    return x_up, x_dn


def _make_vertical_kernel(W, k, rpi):
    """Specialized kernel for weights whose first/last columns are all zero (the module's
    fixed sharpen weight): out = w[0,1]*x_up + w[1,1]*x + w[2,1]*x_dn."""
    def kernel(w_ref, x_ref, o_ref):
        w01 = w_ref[0, 1]
        w11 = w_ref[1, 1]
        w21 = w_ref[2, 1]
        x = x_ref[...]
        x_up, x_dn = _row_neighbors(x, W, k, rpi)
        o_ref[...] = (w01 * x_up + w11 * x + w21 * x_dn).astype(o_ref.dtype)
    return kernel


def _make_general_kernel(W, k, rpi):
    """General reflection-padded 3x3 cross-correlation (any weight)."""
    def kernel(w_ref, x_ref, o_ref):
        bg, L = x_ref.shape
        w = [[w_ref[i, j] for j in range(3)] for i in range(3)]   # hoisted scalar SMEM reads
        x = x_ref[...]
        x_up, x_dn = _row_neighbors(x, W, k, rpi)

        # vertical MACs per column tap (VPU)
        v_l = w[0][0] * x_up + w[1][0] * x + w[2][0] * x_dn
        v_c = w[0][1] * x_up + w[1][1] * x + w[2][1] * x_dn
        v_r = w[0][2] * x_up + w[1][2] * x + w[2][2] * x_dn

        # column direction: lane roll by 1 within each W-wide segment (one image row) plus a
        # one-column reflection fix; the fix also removes the cross-segment (cross-row) wrap.
        lane = lax.broadcasted_iota(jnp.int32, (1, L), 1)
        c_in = lane % W
        c_l = jnp.where(c_in == 0, _lane_roll(v_l, L - 1, L), _lane_roll(v_l, 1, L))
        c_r = jnp.where(c_in == W - 1, _lane_roll(v_r, 1, L), _lane_roll(v_r, L - 1, L))
        o_ref[...] = (c_l + v_c + c_r).astype(o_ref.dtype)
    return kernel


def _choose_fold(H, W):
    """Fold k image rows (k | H) into the lane axis: prefer the smallest k with k*W a multiple
    of 128 (lane-dense, unmasked stores); otherwise the largest divisor with k*W <= 1024."""
    best = 1
    for k in range(1, H + 1):
        if H % k:
            continue
        if k * W > 1024:
            break
        best = k
        if (k * W) % 128 == 0:
            return k
    return best


@partial(jax.jit, static_argnames=("vertical_only",))
def _sharpen_impl(x, weight, *, vertical_only):
    N, C, H, W = x.shape
    if C != 1:
        raise ValueError("Sharpen_Block uses Conv2d(1, 1, 3): expects a single channel")
    if H < 2 or W < 2:
        raise ValueError("ReflectionPad2d(1) needs H, W >= 2 (same as PyTorch)")

    # ---- lane-dense folded layout: (N, 1, H, W) -> (G, L), L = k*W, k | H (layout only) ------
    k = _choose_fold(H, W)
    L = k * W
    G = (N * H) // k
    rpi = H // k                                  # folded rows per image
    x2d = x.reshape(G, L)

    # ---- block sizing: image-aligned, multiple of 8 sublanes, ~2 MiB, >=2 grid steps ---------
    align = rpi * 8 // math.gcd(rpi, 8)           # lcm(rows-per-image, 8)
    row_bytes = L * x.dtype.itemsize
    target_bytes = (2 << 20) if vertical_only else (1 << 20)   # general path has more temps
    if G <= align:
        bg = G                                    # single full block (tiny inputs)
    else:
        bg = max(align, (max(1, target_bytes // row_bytes) // align) * align)
        half = max(align, (G // (2 * align)) * align)   # >=2 steps so both v7x TCs get work
        bg = min(bg, half, (G // align) * align)
    grid = (pl.cdiv(G, bg),)
    # Partial last blocks are safe: blocks end on image boundaries, so the reflection selects
    # never read the padded garbage rows into valid outputs, and OOB output rows are discarded.
    # TODO(synk): row-strip (1-row halo) tiling for single images too large for one VMEM block;
    # current policy only tiles at whole-image granularity along the folded row axis.

    make_kernel = _make_vertical_kernel if vertical_only else _make_general_kernel
    flops_per_elem = 6 if vertical_only else 18
    grid_spec = pltpu.PrefetchScalarGridSpec(
        num_scalar_prefetch=0,
        grid=grid,
        in_specs=[
            pl.BlockSpec(memory_space=pltpu.SMEM),        # 3x3 weights: scalar reads
            pl.BlockSpec((bg, L), lambda i: (i, 0)),      # whole images per step
        ],
        out_specs=pl.BlockSpec((bg, L), lambda i: (i, 0)),
    )
    out2d = pl.pallas_call(
        make_kernel(W, k, rpi),
        out_shape=jax.ShapeDtypeStruct((G, L), x.dtype),
        grid_spec=grid_spec,
        compiler_params=pltpu.CompilerParams(
            dimension_semantics=("parallel",),
            vmem_limit_bytes=40 * 1024 * 1024,            # blocks + temps, headroom on v7x
        ),
        cost_estimate=pl.CostEstimate(
            flops=int(flops_per_elem * N * H * W),
            transcendentals=0,
            bytes_accessed=int(2 * N * H * W * x.dtype.itemsize),
        ),
    )(weight, x2d)
    return out2d.reshape(N, 1, H, W)


def sharpen_block(x, weight):
    """x: (N, 1, H, W) float32, weight: (3, 3) float32 -> (N, 1, H, W) float32.

    `weight` is the module's deterministic, non-trainable constant, so it is inspected on the
    host to pick the zero-column-specialized kernel; arbitrary 3x3 weights use the general path.
    """
    w_np = np.asarray(jax.device_get(jnp.asarray(weight, dtype=jnp.float32)))
    vertical_only = bool(np.all(w_np[:, 0] == 0.0) and np.all(w_np[:, 2] == 0.0))
    return _sharpen_impl(x, jnp.asarray(w_np), vertical_only=vertical_only)


def _reference(x, weight):
    # Pure-JAX reference: reflection pad + valid cross-correlation (sanity check only).
    xp = jnp.pad(x, ((0, 0), (0, 0), (1, 1), (1, 1)), mode="reflect")
    w = weight.reshape(1, 1, 3, 3)
    return lax.conv_general_dilated(
        xp, w, window_strides=(1, 1), padding="VALID",
        dimension_numbers=("NCHW", "OIHW", "NCHW"),
    )


if __name__ == "__main__":
    # Fixed sharpening kernel from the module's __init__ (deterministic, not trainable).
    weight = jnp.array(
        [[0.0, -0.4, 0.0],
         [0.0,  2.6, 0.0],
         [0.0, -0.4, 0.0]],
        dtype=jnp.float32,
    )

    key = jax.random.PRNGKey(0)
    k1, k2, k3 = jax.random.split(key, 3)

    # Primary check: module-consistent shape (N=2, C=1, 16x16) with the fixed weight
    # (specialized vertical-only kernel; 8 image rows folded into 128 lanes).
    x = jax.random.normal(k1, (2, 1, 16, 16), dtype=jnp.float32)
    out = jax.block_until_ready(sharpen_block(x, weight))
    ref = jax.block_until_ready(_reference(x, weight))
    if not np.allclose(np.asarray(out), np.asarray(ref), atol=1e-5, rtol=1e-5):
        raise AssertionError("vertical-specialized kernel does not match reference")

    # Secondary check: a non-128-aligned fold (H=12, W=20 -> 240 lanes, rpi=1).
    x2 = jax.random.normal(k2, (3, 1, 12, 20), dtype=jnp.float32)
    out2 = jax.block_until_ready(sharpen_block(x2, weight))
    ref2 = jax.block_until_ready(_reference(x2, weight))
    if not np.allclose(np.asarray(out2), np.asarray(ref2), atol=1e-5, rtol=1e-5):
        raise AssertionError("folded-layout kernel does not match reference")

    # Tertiary check: general 3x3 path with a dense random weight.
    w_full = jax.random.normal(k3, (3, 3), dtype=jnp.float32)
    out3 = jax.block_until_ready(sharpen_block(x, w_full))
    ref3 = jax.block_until_ready(_reference(x, w_full))
    if not np.allclose(np.asarray(out3), np.asarray(ref3), atol=1e-4, rtol=1e-4):
        raise AssertionError("general 3x3 kernel does not match reference")

    print("KERNEL_OK")
</pallas_src>

<mosaic_0001>
module attributes {stable_mosaic.version = 11 : i64} {
  func.func @kernel(%arg0: i32, %arg1: memref<3x3xf32, #tpu.memory_space<smem>>, %arg2: memref<4x128xf32, #tpu.memory_space<vmem>>, %arg3: memref<4x128xf32, #tpu.memory_space<vmem>>) attributes {dimension_semantics = [#tpu.dimension_semantics<parallel>], iteration_bounds = array<i64: 1>, scalar_prefetch = 0 : i64, scratch_operands = 0 : i64, tpu.core_type = #tpu.core_type<tc>, window_params = [{transform_indices = @transform_0, window_bounds = array<i64: 3, 3>}, {transform_indices = @transform_1, window_bounds = array<i64: 4, 128>}, {transform_indices = @transform_2, window_bounds = array<i64: 4, 128>}]} {
    %c0 = arith.constant 0 : index
    %c1 = arith.constant 1 : index
    %0 = memref.load %arg1[%c0, %c1] : memref<3x3xf32, #tpu.memory_space<smem>>
    %c1_0 = arith.constant 1 : index
    %c1_1 = arith.constant 1 : index
    %1 = memref.load %arg1[%c1_0, %c1_1] : memref<3x3xf32, #tpu.memory_space<smem>>
    %c2 = arith.constant 2 : index
    %c1_2 = arith.constant 1 : index
    %2 = memref.load %arg1[%c2, %c1_2] : memref<3x3xf32, #tpu.memory_space<smem>>
    %c0_3 = arith.constant 0 : index
    %c0_4 = arith.constant 0 : index
    %3 = vector.load %arg2[%c0_3, %c0_4] : memref<4x128xf32, #tpu.memory_space<vmem>>, vector<4x128xf32>
    %c16_i32 = arith.constant 16 : i32
    %4 = tpu.dynamic_rotate %3 by %c16_i32 dim 1 : vector<4x128xf32>, i32 -> vector<4x128xf32>
    %c112_i32 = arith.constant 112 : i32
    %5 = tpu.dynamic_rotate %3 by %c112_i32 dim 1 : vector<4x128xf32>, i32 -> vector<4x128xf32>
    %6 = tpu.iota {dimensions = array<i32: 1>} : vector<1x128xi32>
    %c16_i32_5 = arith.constant 16 : i32
    %7 = vector.broadcast %c16_i32_5 : i32 to vector<1x128xi32>
    %8 = arith.cmpi slt, %6, %7 : vector<1x128xi32>
    %c112_i32_6 = arith.constant 112 : i32
    %9 = vector.broadcast %c112_i32_6 : i32 to vector<1x128xi32>
    %10 = arith.cmpi sge, %6, %9 : vector<1x128xi32>
    %c1_i32 = arith.constant 1 : i32
    %11 = tpu.dynamic_rotate %4 by %c1_i32 dim 0 : vector<4x128xf32>, i32 -> vector<4x128xf32>
    %12 = vector.shape_cast %8 : vector<1x128xi1> to vector<1x128xi1>
    %13 = vector.broadcast %12 : vector<1x128xi1> to vector<4x128xi1>
    %14 = arith.select %13, %11, %4 : vector<4x128xi1>, vector<4x128xf32>
    %c3_i32 = arith.constant 3 : i32
    %15 = tpu.dynamic_rotate %5 by %c3_i32 dim 0 : vector<4x128xf32>, i32 -> vector<4x128xf32>
    %16 = vector.shape_cast %10 : vector<1x128xi1> to vector<1x128xi1>
    %17 = vector.broadcast %16 : vector<1x128xi1> to vector<4x128xi1>
    %18 = arith.select %17, %15, %5 : vector<4x128xi1>, vector<4x128xf32>
    %19 = tpu.iota {dimensions = array<i32: 0>} : vector<4x1xi32>
    %c2_i32 = arith.constant 2 : i32
    %c0_i32 = arith.constant 0 : i32
    %20 = arith.cmpi eq, %c2_i32, %c0_i32 : i32
    %c1_i32_7 = arith.constant 1 : i32
    %21 = arith.select %20, %c1_i32_7, %c2_i32 : i32
    %22 = vector.broadcast %21 : i32 to vector<4x1xi32>
    %23 = arith.remsi %19, %22 : vector<4x1xi32>
    %c0_i32_8 = arith.constant 0 : i32
    %24 = vector.broadcast %c0_i32_8 : i32 to vector<4x1xi32>
    %25 = arith.cmpi ne, %23, %24 : vector<4x1xi32>
    %c0_i32_9 = arith.constant 0 : i32
    %26 = vector.broadcast %c0_i32_9 : i32 to vector<4x1xi32>
    %27 = arith.cmpi slt, %23, %26 : vector<4x1xi32>
    %c0_i32_10 = arith.constant 0 : i32
    %28 = arith.cmpi slt, %21, %c0_i32_10 : i32
    %29 = vector.broadcast %28 : i1 to vector<4x1xi1>
    %30 = vector.broadcast %29 : vector<4x1xi1> to vector<4x1xi1>
    %31 = arith.xori %27, %30 : vector<4x1xi1>
    %32 = arith.andi %31, %25 : vector<4x1xi1>
    %33 = vector.broadcast %21 : i32 to vector<4x1xi32>
    %34 = arith.addi %23, %33 : vector<4x1xi32>
    %35 = arith.select %32, %34, %23 : vector<4x1xi1>, vector<4x1xi32>
    %c0_i32_11 = arith.constant 0 : i32
    %36 = vector.broadcast %c0_i32_11 : i32 to vector<4x1xi32>
    %37 = arith.cmpi eq, %35, %36 : vector<4x1xi32>
    %c1_i32_12 = arith.constant 1 : i32
    %38 = vector.broadcast %c1_i32_12 : i32 to vector<4x1xi32>
    %39 = arith.cmpi eq, %35, %38 : vector<4x1xi32>
    %40 = vector.broadcast %37 : vector<4x1xi1> to vector<4x128xi1>
    %41 = vector.broadcast %8 : vector<1x128xi1> to vector<4x128xi1>
    %42 = arith.andi %40, %41 : vector<4x128xi1>
    %43 = vector.broadcast %39 : vector<4x1xi1> to vector<4x128xi1>
    %44 = vector.broadcast %10 : vector<1x128xi1> to vector<4x128xi1>
    %45 = arith.andi %43, %44 : vector<4x128xi1>
    %46 = arith.select %42, %18, %14 : vector<4x128xi1>, vector<4x128xf32>
    %47 = arith.select %45, %14, %18 : vector<4x128xi1>, vector<4x128xf32>
    %48 = vector.broadcast %0 : f32 to vector<4x128xf32>
    %49 = arith.mulf %48, %46 : vector<4x128xf32>
    %50 = vector.broadcast %1 : f32 to vector<4x128xf32>
    %51 = arith.mulf %50, %3 : vector<4x128xf32>
    %52 = arith.addf %49, %51 : vector<4x128xf32>
    %53 = vector.broadcast %2 : f32 to vector<4x128xf32>
    %54 = arith.mulf %53, %47 : vector<4x128xf32>
    %55 = arith.addf %52, %54 : vector<4x128xf32>
    %c0_13 = arith.constant 0 : index
    %c0_14 = arith.constant 0 : index
    %56 = vector.load %arg3[%c0_13, %c0_14] : memref<4x128xf32, #tpu.memory_space<vmem>>, vector<4x128xf32>
    tpu.vector_store %arg3[%c0_13, %c0_14], %55 {strides = array<i32>} : memref<4x128xf32, #tpu.memory_space<vmem>>, vector<4x128xf32>,
    return
  }
  func.func @transform_0(%arg0: i32) -> (i32, i32) {
    %c0_i32 = arith.constant 0 : i32
    %c0_i32_0 = arith.constant 0 : i32
    %c0_i32_1 = arith.constant 0 : i32
    return %c0_i32, %c0_i32_0 : i32, i32
  }
  func.func @transform_1(%arg0: i32) -> (i32, i32) {
    %c0_i32 = arith.constant 0 : i32
    %c0_i32_0 = arith.constant 0 : i32
    return %arg0, %c0_i32 : i32, i32
  }
  func.func @transform_2(%arg0: i32) -> (i32, i32) {
    %c0_i32 = arith.constant 0 : i32
    %c0_i32_0 = arith.constant 0 : i32
    return %arg0, %c0_i32 : i32, i32
  }
}

</mosaic_0001>

<llo_original>
// kernel: _sharpen_impl.1
$region0: #{_sharpen_impl.1}
  #allocation0 [shape = 'u32[]', space=smem, size = 0x4, offset = 0x4, fixed_abs, tag = 'smem constant byte address 0x4 - core index']
  #allocation1 [shape = 'u32[144,128]{1,0:T(1,128)}', space=vmem, size = 0x12000, scoped, tag = 'internal scratch']
  %s0 = inlined_call_operand.vmem [shape: f32[3,3], index: 0, kind: input, shape index: {}]
  %s1 = inlined_call_operand.vmem [shape: f32[4,128], index: 1, kind: input, shape index: {}]
  %s2 = inlined_call_operand.vmem [shape: f32[4,128], index: 2, kind: output, shape index: {}]
  %s3 = sld [smem:[#allocation0]]
  $region22: #{_sharpen_impl.1} parent=0
    _
  %s5 = ssub.s32 1, %s3
  %s6 = scalar_select 0, %s5, %s3
  $region1: #{_sharpen_impl.1} parent=0
    #allocation2 [shape = 'u8[2048]{0}', space=smem, size = 0x800, scoped, tag = 'input window, operand 0, single buffered']
    #allocation3 [shape = 's32[1]{0}', space=sflag, size = 0x4, scoped, tag = 'scoped memory for _sharpen_impl.1']
    %7 = vsyncpa [#allocation3], 0
    // Predicated region
    $region2: #{_sharpen_impl.1} parent=1 // pred_check
      _
    $region3: #{_sharpen_impl.1} parent=1 // pred_check_branch
      %9 = sbr.rel (0) target = $region5
    $region4: #{_sharpen_impl.1} parent=1 // pred_region
      %s11 = ssub.s32 64, 64
      %12 = vsyncadd [#allocation3], %s11
      %s14 = sshll.u32 %s0, 4
      %s15 = int_to_ptr.vmem [resolvable:$true] %s14
      %17 = dma.vmem_to_smem %s15, 64, [#allocation2], [#allocation3]
    $region5: #{_sharpen_impl.1} parent=1 // pred_fallthru
      _
    // Predicated region
    $region6: #{_sharpen_impl.1} parent=1 // pred_check
      _
    $region7: #{_sharpen_impl.1} parent=1 // pred_check_branch
      %19 = sbr.rel (0) target = $region9
    $region8: #{_sharpen_impl.1} parent=1 // pred_region
      _
    $region9: #{_sharpen_impl.1} parent=1 // pred_fallthru
      _
    // Predicated region
    $region10: #{_sharpen_impl.1} parent=1 // pred_check
      _
    $region11: #{_sharpen_impl.1} parent=1 // pred_check_branch
      %21 = sbr.rel (0) target = $region13
    $region12: #{_sharpen_impl.1} parent=1 // pred_region
      %22 = dma.done [#allocation3], 64
    $region13: #{_sharpen_impl.1} parent=1 // pred_fallthru
      _
    %23 = sfence
    %s24 = sld [smem:[#allocation2 + $0x1]]
    %s25 = sld [smem:[#allocation2 + $0x81]]
    %s26 = sld [smem:[#allocation2 + $0x101]]
    %v27 = vld [vmem:[%s1] sm:$0xf]
    %28 = vrot.lane.b32.xlu0 %v27, 16
    %v29 = vpop.permute.xlu0 %28
    %30 = vrot.lane.b32.xlu0 %v27, 112
    %v31 = vpop.permute.xlu0 %30
    %v32 = vlaneseq
    %v33 = vand.u32 %v32, 127
    %vm34 = vcmp.lt.s32.totalorder %v33, 16
    %vm35 = vcmp.ge.s32.totalorder %v33, 112
    %vm36 = vcmask 1047556
    %v37 = vrot.slane %v29, 4
    %v38 = vsel %vm36, %v37, %v29
    %v39 = vrot.slane %v38, 4
    %v40 = vsel %vm36, %v39, %v29
    %v41 = vsel %vm34, 1, 0
    %vm42 = vcmp.eq.s32.totalorder %v41, 1
    %v44 = vrot.slane %v29, 5
    %v46 = vsel %vm42, %v40, %v44
    %v47 = vrot.slane %v31, 4
    %v48 = vsel %vm36, %v47, %v31
    %v49 = vrot.slane %v48, 4
    %v50 = vsel %vm36, %v49, %v31
    %v51 = vsel %vm35, 1, 0
    %vm52 = vcmp.eq.s32.totalorder %v51, 1
    %v54 = vrot.slane %v31, 7
    %v56 = vsel %vm52, %v50, %v54
    %v57 = vlaneseq
    %v58 = vshrl.u32 %v57, 7
    %vm59 = vcmp.lt.s32.totalorder %v58, 0
    %v60 = vsub.s32 0, %v58
    %v61 = vsel %vm59, %v60, %v58
    %v62 = vshrl.u32 %v61, 1
    %v63 = vand.u32 %v61, 1
    %v64 = vsub.s32 0, %v63
    %v65 = vsel %vm59, %v64, %v63
    %vm66 = vcmp.ne.s32.totalorder %v65, 0
    %vm67 = vcmp.lt.s32.totalorder %v65, 0
    %vm68 = vmand %vm67, %vm66
    %v69 = vadd.s32 %v65, 2
    %v70 = vsel %vm68, %v69, %v65
    %vm71 = vcmp.eq.s32.totalorder %v70, 0
    %vm72 = vcmp.eq.s32.totalorder %v70, 1
    %v73 = vsel %vm71, 1, 0
    %vm74 = vcmp.eq.s32.totalorder %v73, 1
    %vm75 = vmand %vm74, %vm42
    %v76 = vsel %vm72, 1, 0
    %vm77 = vcmp.eq.s32.totalorder %v76, 1
    %vm78 = vmand %vm77, %vm52
    %v80 = vrot.slane %v56, 1
    %v83 = vrot.slane %v46, 3
    %v85 = vsel %vm75, %v80, %v83
    %v86 = vsel %vm78, %v83, %v80
    %v87 = vstv %s24
    %v88 = vmul.f32 %v87, %v85
    %v89 = vstv %s25
    %v90 = vmul.f32 %v89, %v27
    %v91 = vadd.f32 %v88, %v90
    %v92 = vstv %s26
    %v93 = vmul.f32 %v92, %v86
    %v94 = vadd.f32 %v91, %v93
    %95 = vst [vmem:[%s2] sm:$0xf] %v94
    // Predicated region
    $region14: #{_sharpen_impl.1} parent=1 // pred_check
      _
    $region15: #{_sharpen_impl.1} parent=1 // pred_check_branch
      %97 = sbr.rel (0) target = $region17
    $region16: #{_sharpen_impl.1} parent=1 // pred_region
      _
    $region17: #{_sharpen_impl.1} parent=1 // pred_fallthru
      _
    // Predicated region
    $region18: #{_sharpen_impl.1} parent=1 // pred_check
      _
    $region19: #{_sharpen_impl.1} parent=1 // pred_check_branch
      %99 = sbr.rel (0) target = $region21
    $region20: #{_sharpen_impl.1} parent=1 // pred_region
      _
    $region21: #{_sharpen_impl.1} parent=1 // pred_fallthru
      _
    %100 = vsyncpa [#allocation3], 1

</llo_original>
